<compile_context>
chip_gen: v7x
topology: tpu7x:2x2x1
jax: 0.10.0
libtpu: 0.0.40
codegen_flags: <defaults>
</compile_context>

<pallas_src>
import functools

import jax
import jax.numpy as jnp
from jax.experimental import pallas as pl
from jax.experimental.pallas import tpu as pltpu

LOG_SIG_MIN = -20.0
LOG_SIG_MAX = 2.0
TANH_EPS = 1e-6


def _round_up(x, m):
    return ((x + m - 1) // m) * m


def _policy_kernel(obs_ref, z_ref, eps_ref,
                   w1o_ref, w1z_ref, b1_ref,
                   w2_ref, b2_ref,
                   wh_ref, bh_ref,
                   out_ref):
    A = eps_ref.shape[1]          # action dim (static)
    P = out_ref.shape[1]          # packed lane width (multiple of 128, static)
    pack = 5 * A + 1

    obs = obs_ref[...]
    z = z_ref[...]
    eps = eps_ref[...]

    # Layer 1: w1 was pre-split into obs/z halves in the wrapper, so the
    # concat([obs, z]) never touches HBM — two accumulated MXU dots instead.
    h = (jnp.dot(obs, w1o_ref[...], preferred_element_type=jnp.float32)
         + jnp.dot(z, w1z_ref[...], preferred_element_type=jnp.float32)
         + b1_ref[...])
    h = jnp.maximum(h, 0.0)

    # Layer 2 (relu)
    h = jnp.dot(h, w2_ref[...], preferred_element_type=jnp.float32) + b2_ref[...]
    h = jnp.maximum(h, 0.0)

    # Fused mean | log_std head: a single MXU matmul, sliced afterwards.
    heads = jnp.dot(h, wh_ref[...], preferred_element_type=jnp.float32) + bh_ref[...]
    mean = heads[:, :A]
    log_std = jnp.clip(heads[:, A:2 * A], LOG_SIG_MIN, LOG_SIG_MAX)
    std = jnp.exp(log_std)

    # Reparameterized sample through tanh.
    pre_tanh = mean + std * eps
    action = jnp.tanh(pre_tanh)

    # Normal(mean, std).log_prob(pre_tanh): since pre_tanh - mean == std*eps,
    # the quadratic term is exactly -0.5*eps^2 (no var, no divide needed).
    per_dim_lp = (-0.5 * (eps * eps)
                  - log_std
                  - 0.5 * jnp.log(2.0 * jnp.pi)
                  - jnp.log(1.0 - action * action + TANH_EPS))
    log_prob = jnp.sum(per_dim_lp, axis=1, keepdims=True)

    # Pack everything into one lane-dense output slab:
    # [action | mean | log_std | std | pre_tanh | log_prob | zero pad -> P]
    out_ref[:, 0 * A:1 * A] = action
    out_ref[:, 1 * A:2 * A] = mean
    out_ref[:, 2 * A:3 * A] = log_std
    out_ref[:, 3 * A:4 * A] = std
    out_ref[:, 4 * A:5 * A] = pre_tanh
    out_ref[:, 5 * A:5 * A + 1] = log_prob
    if P > pack:  # static at trace time
        out_ref[:, pack:P] = jnp.zeros((obs.shape[0], P - pack), jnp.float32)


def pearl_agent2_forward(obs, z, params, eps, *, batch_tile=512):
    """Pallas implementation of PEARLAgent2.forward.

    obs: [B, obs_dim], z: [B, latent_dim], eps: [B, action_dim] N(0,1) noise
    (the rsample noise, supplied explicitly for determinism).
    Returns (policy_outputs, None) matching the PyTorch tuple layout.
    """
    obs = obs.astype(jnp.float32)
    z = z.astype(jnp.float32)
    eps = eps.astype(jnp.float32)

    B, obs_dim = obs.shape
    latent_dim = z.shape[1]
    H = params["w1"].shape[1]
    A = params["w_mean"].shape[1]

    # Weight plumbing (constant-folded under jit): split w1, fuse the heads.
    w1_obs = params["w1"][:obs_dim, :]
    w1_z = params["w1"][obs_dim:, :]
    w_head = jnp.concatenate([params["w_mean"], params["w_logstd"]], axis=1)
    b_head = jnp.concatenate([params["b_mean"], params["b_logstd"]], axis=1)

    pack = 5 * A + 1
    P = _round_up(pack, 128)          # lane-dense packed output width

    # Batch tiling: sublane-align, then tile so the grid pipelines / megacores.
    B_pad = _round_up(max(B, 1), 8)
    TB = min(B_pad, batch_tile)
    B_pad = _round_up(B_pad, TB)
    if B_pad != B:
        pad = B_pad - B
        obs_p = jnp.pad(obs, ((0, pad), (0, 0)))
        z_p = jnp.pad(z, ((0, pad), (0, 0)))
        eps_p = jnp.pad(eps, ((0, pad), (0, 0)))
    else:
        obs_p, z_p, eps_p = obs, z, eps

    grid = (B_pad // TB,)

    packed = pl.pallas_call(
        _policy_kernel,
        out_shape=jax.ShapeDtypeStruct((B_pad, P), jnp.float32),
        grid_spec=pltpu.PrefetchScalarGridSpec(
            num_scalar_prefetch=0,
            grid=grid,
            in_specs=[
                # per-batch-tile activations
                pl.BlockSpec((TB, obs_dim), lambda i: (i, 0)),
                pl.BlockSpec((TB, latent_dim), lambda i: (i, 0)),
                pl.BlockSpec((TB, A), lambda i: (i, 0)),
                # weights: constant block index -> stay VMEM-resident
                pl.BlockSpec((obs_dim, H), lambda i: (0, 0)),
                pl.BlockSpec((latent_dim, H), lambda i: (0, 0)),
                pl.BlockSpec((1, H), lambda i: (0, 0)),
                pl.BlockSpec((H, H), lambda i: (0, 0)),
                pl.BlockSpec((1, H), lambda i: (0, 0)),
                pl.BlockSpec((H, 2 * A), lambda i: (0, 0)),
                pl.BlockSpec((1, 2 * A), lambda i: (0, 0)),
            ],
            out_specs=pl.BlockSpec((TB, P), lambda i: (i, 0)),
        ),
        compiler_params=pltpu.CompilerParams(
            dimension_semantics=("parallel",)),
    )(obs_p, z_p, eps_p,
      w1_obs, w1_z, params["b1"],
      params["w2"], params["b2"],
      w_head, b_head)

    # Slice the slab apart (layout plumbing only, no compute).
    action = packed[:B, 0 * A:1 * A]
    mean = packed[:B, 1 * A:2 * A]
    log_std = packed[:B, 2 * A:3 * A]
    std = packed[:B, 3 * A:4 * A]
    pre_tanh = packed[:B, 4 * A:5 * A]
    log_prob = packed[:B, 5 * A:5 * A + 1]

    expected_log_prob = None          # PyTorch policy returns None for these
    mean_action_log_prob = None
    policy_outputs = (action, mean, log_std, log_prob,
                      expected_log_prob, std, mean_action_log_prob, pre_tanh)
    return policy_outputs, None


def init_params(key, in_dim, hidden_dim, action_dim):
    ks = jax.random.split(key, 8)

    def lin(kw, kb, fan_in, fan_out):
        bound = 1.0 / jnp.sqrt(fan_in)
        w = jax.random.uniform(kw, (fan_in, fan_out), jnp.float32, -bound, bound)
        b = jax.random.uniform(kb, (1, fan_out), jnp.float32, -bound, bound)
        return w, b

    w1, b1 = lin(ks[0], ks[1], in_dim, hidden_dim)
    w2, b2 = lin(ks[2], ks[3], hidden_dim, hidden_dim)
    wm, bm = lin(ks[4], ks[5], hidden_dim, action_dim)
    ws, bs = lin(ks[6], ks[7], hidden_dim, action_dim)
    return {
        "w1": w1, "b1": b1,
        "w2": w2, "b2": b2,
        "w_mean": wm, "b_mean": bm,
        "w_logstd": ws, "b_logstd": bs,
    }


if __name__ == "__main__":
    # Small shapes consistent with the module's forward.
    batch = 8
    obs_dim = 24
    latent_dim = 8
    hidden_dim = 32
    action_dim = 8

    key = jax.random.PRNGKey(0)
    k_obs, k_z, k_eps, k_params = jax.random.split(key, 4)

    obs = jax.random.normal(k_obs, (batch, obs_dim), jnp.float32)
    z = jax.random.normal(k_z, (batch, latent_dim), jnp.float32)
    eps = jax.random.normal(k_eps, (batch, action_dim), jnp.float32)  # rsample noise
    params = init_params(k_params, obs_dim + latent_dim, hidden_dim, action_dim)

    fwd = jax.jit(pearl_agent2_forward)
    policy_outputs, _ = fwd(obs, z, params, eps)
    jax.block_until_ready([o for o in policy_outputs if o is not None])

    # quick sanity against pure-JAX reference
    in_ = jnp.concatenate([obs, z], axis=1)
    h = jnp.maximum(in_ @ params["w1"] + params["b1"], 0.0)
    h = jnp.maximum(h @ params["w2"] + params["b2"], 0.0)
    mean_ref = h @ params["w_mean"] + params["b_mean"]
    log_std_ref = jnp.clip(h @ params["w_logstd"] + params["b_logstd"],
                           LOG_SIG_MIN, LOG_SIG_MAX)
    std_ref = jnp.exp(log_std_ref)
    pre_tanh_ref = mean_ref + std_ref * eps
    action_ref = jnp.tanh(pre_tanh_ref)
    lp_ref = (-((pre_tanh_ref - mean_ref) ** 2) / (2.0 * std_ref ** 2)
              - log_std_ref - 0.5 * jnp.log(2.0 * jnp.pi)
              - jnp.log(1.0 - action_ref ** 2 + TANH_EPS)).sum(axis=1, keepdims=True)

    action, mean, log_std, log_prob, std, pre_tanh = (
        policy_outputs[0], policy_outputs[1], policy_outputs[2],
        policy_outputs[3], policy_outputs[5], policy_outputs[7])

    assert jnp.allclose(action, action_ref, atol=1e-5)
    assert jnp.allclose(mean, mean_ref, atol=1e-5)
    assert jnp.allclose(log_std, log_std_ref, atol=1e-5)
    assert jnp.allclose(log_prob, lp_ref, atol=1e-4)
    assert jnp.allclose(std, std_ref, atol=1e-5)
    assert jnp.allclose(pre_tanh, pre_tanh_ref, atol=1e-5)

    print("KERNEL_OK")
</pallas_src>

<mosaic_0001>
module attributes {stable_mosaic.version = 11 : i64} {
  func.func @_policy_kernel(%arg0: i32, %arg1: memref<8x24xf32, #tpu.memory_space<vmem>>, %arg2: memref<8x8xf32, #tpu.memory_space<vmem>>, %arg3: memref<8x8xf32, #tpu.memory_space<vmem>>, %arg4: memref<24x32xf32, #tpu.memory_space<vmem>>, %arg5: memref<8x32xf32, #tpu.memory_space<vmem>>, %arg6: memref<1x32xf32, #tpu.memory_space<vmem>>, %arg7: memref<32x32xf32, #tpu.memory_space<vmem>>, %arg8: memref<1x32xf32, #tpu.memory_space<vmem>>, %arg9: memref<32x16xf32, #tpu.memory_space<vmem>>, %arg10: memref<1x16xf32, #tpu.memory_space<vmem>>, %arg11: memref<8x128xf32, #tpu.memory_space<vmem>>) attributes {dimension_semantics = [#tpu.dimension_semantics<parallel>], iteration_bounds = array<i64: 1>, scalar_prefetch = 0 : i64, scratch_operands = 0 : i64, tpu.core_type = #tpu.core_type<tc>, window_params = [{transform_indices = @transform_0, window_bounds = array<i64: 8, 24>}, {transform_indices = @transform_1, window_bounds = array<i64: 8, 8>}, {transform_indices = @transform_2, window_bounds = array<i64: 8, 8>}, {pipeline_mode = #tpu.pipeline_mode<synchronous>, transform_indices = @transform_3, window_bounds = array<i64: 24, 32>}, {pipeline_mode = #tpu.pipeline_mode<synchronous>, transform_indices = @transform_4, window_bounds = array<i64: 8, 32>}, {pipeline_mode = #tpu.pipeline_mode<synchronous>, transform_indices = @transform_5, window_bounds = array<i64: 1, 32>}, {pipeline_mode = #tpu.pipeline_mode<synchronous>, transform_indices = @transform_6, window_bounds = array<i64: 32, 32>}, {pipeline_mode = #tpu.pipeline_mode<synchronous>, transform_indices = @transform_7, window_bounds = array<i64: 1, 32>}, {pipeline_mode = #tpu.pipeline_mode<synchronous>, transform_indices = @transform_8, window_bounds = array<i64: 32, 16>}, {pipeline_mode = #tpu.pipeline_mode<synchronous>, transform_indices = @transform_9, window_bounds = array<i64: 1, 16>}, {transform_indices = @transform_10, window_bounds = array<i64: 8, 128>}]} {
    %c0 = arith.constant 0 : index
    %c0_0 = arith.constant 0 : index
    %0 = vector.load %arg1[%c0, %c0_0] : memref<8x24xf32, #tpu.memory_space<vmem>>, vector<8x24xf32>
    %c0_1 = arith.constant 0 : index
    %c0_2 = arith.constant 0 : index
    %1 = vector.load %arg2[%c0_1, %c0_2] : memref<8x8xf32, #tpu.memory_space<vmem>>, vector<8x8xf32>
    %c0_3 = arith.constant 0 : index
    %c0_4 = arith.constant 0 : index
    %2 = vector.load %arg3[%c0_3, %c0_4] : memref<8x8xf32, #tpu.memory_space<vmem>>, vector<8x8xf32>
    %c0_5 = arith.constant 0 : index
    %c0_6 = arith.constant 0 : index
    %3 = vector.load %arg4[%c0_5, %c0_6] : memref<24x32xf32, #tpu.memory_space<vmem>>, vector<24x32xf32>
    %cst = arith.constant dense<0.000000e+00> : vector<8x32xf32>
    %4 = tpu.matmul %0, %3, %cst {dimension_numbers = #tpu.dot_dimension_numbers<[1], [0], [0], [1], [0, 0, 1, 1], [], []>} : vector<8x24xf32>, vector<24x32xf32>, vector<8x32xf32> -> vector<8x32xf32>
    %c0_7 = arith.constant 0 : index
    %c0_8 = arith.constant 0 : index
    %5 = vector.load %arg5[%c0_7, %c0_8] : memref<8x32xf32, #tpu.memory_space<vmem>>, vector<8x32xf32>
    %cst_9 = arith.constant dense<0.000000e+00> : vector<8x32xf32>
    %6 = tpu.matmul %1, %5, %cst_9 {dimension_numbers = #tpu.dot_dimension_numbers<[1], [0], [0], [1], [0, 0, 1, 1], [], []>} : vector<8x8xf32>, vector<8x32xf32>, vector<8x32xf32> -> vector<8x32xf32>
    %7 = arith.addf %4, %6 : vector<8x32xf32>
    %c0_10 = arith.constant 0 : index
    %c0_11 = arith.constant 0 : index
    %8 = vector.load %arg6[%c0_10, %c0_11] : memref<1x32xf32, #tpu.memory_space<vmem>>, vector<1x32xf32>
    %9 = vector.broadcast %8 : vector<1x32xf32> to vector<8x32xf32>
    %10 = arith.addf %7, %9 : vector<8x32xf32>
    %cst_12 = arith.constant 0.000000e+00 : f32
    %11 = vector.broadcast %cst_12 : f32 to vector<8x32xf32>
    %12 = arith.maximumf %10, %11 : vector<8x32xf32>
    %c0_13 = arith.constant 0 : index
    %c0_14 = arith.constant 0 : index
    %13 = vector.load %arg7[%c0_13, %c0_14] : memref<32x32xf32, #tpu.memory_space<vmem>>, vector<32x32xf32>
    %cst_15 = arith.constant dense<0.000000e+00> : vector<8x32xf32>
    %14 = tpu.matmul %12, %13, %cst_15 {dimension_numbers = #tpu.dot_dimension_numbers<[1], [0], [0], [1], [0, 0, 1, 1], [], []>} : vector<8x32xf32>, vector<32x32xf32>, vector<8x32xf32> -> vector<8x32xf32>
    %c0_16 = arith.constant 0 : index
    %c0_17 = arith.constant 0 : index
    %15 = vector.load %arg8[%c0_16, %c0_17] : memref<1x32xf32, #tpu.memory_space<vmem>>, vector<1x32xf32>
    %16 = vector.broadcast %15 : vector<1x32xf32> to vector<8x32xf32>
    %17 = arith.addf %14, %16 : vector<8x32xf32>
    %cst_18 = arith.constant 0.000000e+00 : f32
    %18 = vector.broadcast %cst_18 : f32 to vector<8x32xf32>
    %19 = arith.maximumf %17, %18 : vector<8x32xf32>
    %c0_19 = arith.constant 0 : index
    %c0_20 = arith.constant 0 : index
    %20 = vector.load %arg9[%c0_19, %c0_20] : memref<32x16xf32, #tpu.memory_space<vmem>>, vector<32x16xf32>
    %cst_21 = arith.constant dense<0.000000e+00> : vector<8x16xf32>
    %21 = tpu.matmul %19, %20, %cst_21 {dimension_numbers = #tpu.dot_dimension_numbers<[1], [0], [0], [1], [0, 0, 1, 1], [], []>} : vector<8x32xf32>, vector<32x16xf32>, vector<8x16xf32> -> vector<8x16xf32>
    %c0_22 = arith.constant 0 : index
    %c0_23 = arith.constant 0 : index
    %22 = vector.load %arg10[%c0_22, %c0_23] : memref<1x16xf32, #tpu.memory_space<vmem>>, vector<1x16xf32>
    %23 = vector.broadcast %22 : vector<1x16xf32> to vector<8x16xf32>
    %24 = arith.addf %21, %23 : vector<8x16xf32>
    %25 = vector.extract_strided_slice %24 {offsets = [0, 0], sizes = [8, 8], strides = [1, 1]} : vector<8x16xf32> to vector<8x8xf32>
    %26 = vector.extract_strided_slice %24 {offsets = [0, 8], sizes = [8, 8], strides = [1, 1]} : vector<8x16xf32> to vector<8x8xf32>
    %cst_24 = arith.constant -2.000000e+01 : f32
    %cst_25 = arith.constant 2.000000e+00 : f32
    %27 = vector.broadcast %cst_24 : f32 to vector<8x8xf32>
    %28 = arith.maximumf %27, %26 : vector<8x8xf32>
    %29 = vector.broadcast %cst_25 : f32 to vector<8x8xf32>
    %30 = arith.minimumf %29, %28 : vector<8x8xf32>
    %31 = math.exp %30 : vector<8x8xf32>
    %32 = arith.mulf %31, %2 : vector<8x8xf32>
    %33 = arith.addf %25, %32 : vector<8x8xf32>
    %34 = math.tanh %33 : vector<8x8xf32>
    %35 = arith.mulf %2, %2 : vector<8x8xf32>
    %cst_26 = arith.constant -5.000000e-01 : f32
    %36 = vector.broadcast %cst_26 : f32 to vector<8x8xf32>
    %37 = arith.mulf %36, %35 : vector<8x8xf32>
    %38 = arith.subf %37, %30 : vector<8x8xf32>
    %cst_27 = arith.constant 6.28318548 : f32
    %39 = math.log %cst_27 : f32
    %cst_28 = arith.constant 5.000000e-01 : f32
    %40 = arith.mulf %cst_28, %39 : f32
    %41 = vector.broadcast %40 : f32 to vector<8x8xf32>
    %42 = arith.subf %38, %41 : vector<8x8xf32>
    %43 = arith.mulf %34, %34 : vector<8x8xf32>
    %cst_29 = arith.constant 1.000000e+00 : f32
    %44 = vector.broadcast %cst_29 : f32 to vector<8x8xf32>
    %45 = arith.subf %44, %43 : vector<8x8xf32>
    %cst_30 = arith.constant 9.99999997E-7 : f32
    %46 = vector.broadcast %cst_30 : f32 to vector<8x8xf32>
    %47 = arith.addf %45, %46 : vector<8x8xf32>
    %48 = math.log %47 : vector<8x8xf32>
    %49 = arith.subf %42, %48 : vector<8x8xf32>
    %cst_31 = arith.constant dense<0.000000e+00> : vector<8xf32>
    %50 = vector.multi_reduction <add>, %49, %cst_31 [1] : vector<8x8xf32> to vector<8xf32>
    %51 = vector.shape_cast %50 : vector<8xf32> to vector<8x1xf32>
    %c0_32 = arith.constant 0 : index
    %c0_33 = arith.constant 0 : index
    %52 = vector.load %arg11[%c0_32, %c0_33] : memref<8x128xf32, #tpu.memory_space<vmem>>, vector<8x8xf32>
    tpu.vector_store %arg11[%c0_32, %c0_33], %34 {strides = array<i32>} : memref<8x128xf32, #tpu.memory_space<vmem>>, vector<8x8xf32>,
    %c0_34 = arith.constant 0 : index
    %c8 = arith.constant 8 : index
    %53 = vector.load %arg11[%c0_34, %c8] : memref<8x128xf32, #tpu.memory_space<vmem>>, vector<8x8xf32>
    tpu.vector_store %arg11[%c0_34, %c8], %25 {strides = array<i32>} : memref<8x128xf32, #tpu.memory_space<vmem>>, vector<8x8xf32>,
    %c0_35 = arith.constant 0 : index
    %c16 = arith.constant 16 : index
    %54 = vector.load %arg11[%c0_35, %c16] : memref<8x128xf32, #tpu.memory_space<vmem>>, vector<8x8xf32>
    tpu.vector_store %arg11[%c0_35, %c16], %30 {strides = array<i32>} : memref<8x128xf32, #tpu.memory_space<vmem>>, vector<8x8xf32>,
    %c0_36 = arith.constant 0 : index
    %c24 = arith.constant 24 : index
    %55 = vector.load %arg11[%c0_36, %c24] : memref<8x128xf32, #tpu.memory_space<vmem>>, vector<8x8xf32>
    tpu.vector_store %arg11[%c0_36, %c24], %31 {strides = array<i32>} : memref<8x128xf32, #tpu.memory_space<vmem>>, vector<8x8xf32>,
    %c0_37 = arith.constant 0 : index
    %c32 = arith.constant 32 : index
    %56 = vector.load %arg11[%c0_37, %c32] : memref<8x128xf32, #tpu.memory_space<vmem>>, vector<8x8xf32>
    tpu.vector_store %arg11[%c0_37, %c32], %33 {strides = array<i32>} : memref<8x128xf32, #tpu.memory_space<vmem>>, vector<8x8xf32>,
    %c0_38 = arith.constant 0 : index
    %c40 = arith.constant 40 : index
    %57 = vector.load %arg11[%c0_38, %c40] : memref<8x128xf32, #tpu.memory_space<vmem>>, vector<8x1xf32>
    tpu.vector_store %arg11[%c0_38, %c40], %51 {strides = array<i32>} : memref<8x128xf32, #tpu.memory_space<vmem>>, vector<8x1xf32>,
    %cst_39 = arith.constant 0.000000e+00 : f32
    %58 = vector.broadcast %cst_39 : f32 to vector<8x87xf32>
    %c0_40 = arith.constant 0 : index
    %c41 = arith.constant 41 : index
    %59 = vector.load %arg11[%c0_40, %c41] : memref<8x128xf32, #tpu.memory_space<vmem>>, vector<8x87xf32>
    tpu.vector_store %arg11[%c0_40, %c41], %58 {strides = array<i32>} : memref<8x128xf32, #tpu.memory_space<vmem>>, vector<8x87xf32>,
    return
  }
  func.func @transform_0(%arg0: i32) -> (i32, i32) {
    %c0_i32 = arith.constant 0 : i32
    %c0_i32_0 = arith.constant 0 : i32
    return %arg0, %c0_i32 : i32, i32
  }
  func.func @transform_1(%arg0: i32) -> (i32, i32) {
    %c0_i32 = arith.constant 0 : i32
    %c0_i32_0 = arith.constant 0 : i32
    return %arg0, %c0_i32 : i32, i32
  }
  func.func @transform_2(%arg0: i32) -> (i32, i32) {
    %c0_i32 = arith.constant 0 : i32
    %c0_i32_0 = arith.constant 0 : i32
    return %arg0, %c0_i32 : i32, i32
  }
  func.func @transform_3(%arg0: i32) -> (i32, i32) {
    %c0_i32 = arith.constant 0 : i32
    %c0_i32_0 = arith.constant 0 : i32
    %c0_i32_1 = arith.constant 0 : i32
    return %c0_i32, %c0_i32_0 : i32, i32
  }
  func.func @transform_4(%arg0: i32) -> (i32, i32) {
    %c0_i32 = arith.constant 0 : i32
    %c0_i32_0 = arith.constant 0 : i32
    %c0_i32_1 = arith.constant 0 : i32
    return %c0_i32, %c0_i32_0 : i32, i32
  }
  func.func @transform_5(%arg0: i32) -> (i32, i32) {
    %c0_i32 = arith.constant 0 : i32
    %c0_i32_0 = arith.constant 0 : i32
    %c0_i32_1 = arith.constant 0 : i32
    return %c0_i32, %c0_i32_0 : i32, i32
  }
  func.func @transform_6(%arg0: i32) -> (i32, i32) {
    %c0_i32 = arith.constant 0 : i32
    %c0_i32_0 = arith.constant 0 : i32
    %c0_i32_1 = arith.constant 0 : i32
    return %c0_i32, %c0_i32_0 : i32, i32
  }
  func.func @transform_7(%arg0: i32) -> (i32, i32) {
    %c0_i32 = arith.constant 0 : i32
    %c0_i32_0 = arith.constant 0 : i32
    %c0_i32_1 = arith.constant 0 : i32
    return %c0_i32, %c0_i32_0 : i32, i32
  }
  func.func @transform_8(%arg0: i32) -> (i32, i32) {
    %c0_i32 = arith.constant 0 : i32
    %c0_i32_0 = arith.constant 0 : i32
    %c0_i32_1 = arith.constant 0 : i32
    return %c0_i32, %c0_i32_0 : i32, i32
  }
  func.func @transform_9(%arg0: i32) -> (i32, i32) {
    %c0_i32 = arith.constant 0 : i32
    %c0_i32_0 = arith.constant 0 : i32
    %c0_i32_1 = arith.constant 0 : i32
    return %c0_i32, %c0_i32_0 : i32, i32
  }
  func.func @transform_10(%arg0: i32) -> (i32, i32) {
    %c0_i32 = arith.constant 0 : i32
    %c0_i32_0 = arith.constant 0 : i32
    return %arg0, %c0_i32 : i32, i32
  }
}

</mosaic_0001>

<llo_original>
// kernel: pearl_agent2_forward.1
$region0: #{pearl_agent2_forward.1}
  #allocation0 [shape = 'u32[]', space=smem, size = 0x4, offset = 0x4, fixed_abs, tag = 'smem constant byte address 0x4 - core index']
  #allocation1 [shape = 'u32[144,128]{1,0:T(1,128)}', space=vmem, size = 0x12000, scoped, tag = 'internal scratch']
  %s0 = inlined_call_operand.vmem [shape: f32[8,24], index: 0, kind: input, shape index: {}]
  %s1 = inlined_call_operand.vmem [shape: f32[8,8], index: 1, kind: input, shape index: {}]
  %s2 = inlined_call_operand.vmem [shape: f32[8,8], index: 2, kind: input, shape index: {}]
  %s3 = inlined_call_operand.vmem [shape: f32[24,32], index: 3, kind: input, shape index: {}]
  %s4 = inlined_call_operand.vmem [shape: f32[8,32], index: 4, kind: input, shape index: {}]
  %s5 = inlined_call_operand.vmem [shape: f32[1,32], index: 5, kind: input, shape index: {}]
  %s6 = inlined_call_operand.vmem [shape: f32[32,32], index: 6, kind: input, shape index: {}]
  %s7 = inlined_call_operand.vmem [shape: f32[1,32], index: 7, kind: input, shape index: {}]
  %s8 = inlined_call_operand.vmem [shape: f32[32,16], index: 8, kind: input, shape index: {}]
  %s9 = inlined_call_operand.vmem [shape: f32[1,16], index: 9, kind: input, shape index: {}]
  %s10 = inlined_call_operand.vmem [shape: f32[8,128], index: 10, kind: output, shape index: {}]
  %s11 = sld [smem:[#allocation0]]
  $region50: #{pearl_agent2_forward.1} parent=0
    _
  %s13 = ssub.s32 1, %s11
  %s14 = scalar_select 0, %s13, %s11
  // Predicated region
  $region2: #{pearl_agent2_forward.1} parent=0 // pred_check
    _
  $region3: #{pearl_agent2_forward.1} parent=0 // pred_check_branch
    %16 = sbr.rel (0) target = $region5
  $region4: #{pearl_agent2_forward.1} parent=0 // pred_region
    _
  $region5: #{pearl_agent2_forward.1} parent=0 // pred_fallthru
    _
  // Predicated region
  $region6: #{pearl_agent2_forward.1} parent=0 // pred_check
    _
  $region7: #{pearl_agent2_forward.1} parent=0 // pred_check_branch
    %18 = sbr.rel (0) target = $region9
  $region8: #{pearl_agent2_forward.1} parent=0 // pred_region
    _
  $region9: #{pearl_agent2_forward.1} parent=0 // pred_fallthru
    _
  // Predicated region
  $region10: #{pearl_agent2_forward.1} parent=0 // pred_check
    _
  $region11: #{pearl_agent2_forward.1} parent=0 // pred_check_branch
    %20 = sbr.rel (0) target = $region13
  $region12: #{pearl_agent2_forward.1} parent=0 // pred_region
    _
  $region13: #{pearl_agent2_forward.1} parent=0 // pred_fallthru
    _
  // Predicated region
  $region14: #{pearl_agent2_forward.1} parent=0 // pred_check
    _
  $region15: #{pearl_agent2_forward.1} parent=0 // pred_check_branch
    %22 = sbr.rel (0) target = $region17
  $region16: #{pearl_agent2_forward.1} parent=0 // pred_region
    _
  $region17: #{pearl_agent2_forward.1} parent=0 // pred_fallthru
    _
  // Predicated region
  $region18: #{pearl_agent2_forward.1} parent=0 // pred_check
    _
  $region19: #{pearl_agent2_forward.1} parent=0 // pred_check_branch
    %24 = sbr.rel (0) target = $region21
  $region20: #{pearl_agent2_forward.1} parent=0 // pred_region
    _
  $region21: #{pearl_agent2_forward.1} parent=0 // pred_fallthru
    _
  // Predicated region
  $region22: #{pearl_agent2_forward.1} parent=0 // pred_check
    _
  $region23: #{pearl_agent2_forward.1} parent=0 // pred_check_branch
    %26 = sbr.rel (0) target = $region25
  $region24: #{pearl_agent2_forward.1} parent=0 // pred_region
    _
  $region25: #{pearl_agent2_forward.1} parent=0 // pred_fallthru
    _
  // Predicated region
  $region26: #{pearl_agent2_forward.1} parent=0 // pred_check
    _
  $region27: #{pearl_agent2_forward.1} parent=0 // pred_check_branch
    %28 = sbr.rel (0) target = $region29
  $region28: #{pearl_agent2_forward.1} parent=0 // pred_region
    _
  $region29: #{pearl_agent2_forward.1} parent=0 // pred_fallthru
    _
  // Predicated region
  $region30: #{pearl_agent2_forward.1} parent=0 // pred_check
    _
  $region31: #{pearl_agent2_forward.1} parent=0 // pred_check_branch
    %30 = sbr.rel (0) target = $region33
  $region32: #{pearl_agent2_forward.1} parent=0 // pred_region
    _
  $region33: #{pearl_agent2_forward.1} parent=0 // pred_fallthru
    _
  // Predicated region
  $region34: #{pearl_agent2_forward.1} parent=0 // pred_check
    _
  $region35: #{pearl_agent2_forward.1} parent=0 // pred_check_branch
    %32 = sbr.rel (0) target = $region37
  $region36: #{pearl_agent2_forward.1} parent=0 // pred_region
    _
  $region37: #{pearl_agent2_forward.1} parent=0 // pred_fallthru
    _
  // Predicated region
  $region38: #{pearl_agent2_forward.1} parent=0 // pred_check
    _
  $region39: #{pearl_agent2_forward.1} parent=0 // pred_check_branch
    %34 = sbr.rel (0) target = $region41
  $region40: #{pearl_agent2_forward.1} parent=0 // pred_region
    _
  $region41: #{pearl_agent2_forward.1} parent=0 // pred_fallthru
    _
  %v35 = vld [vmem:[%s0] sm:$0xff]
  %v36 = vld [vmem:[%s1] sm:$0xff]
  %v37 = vld [vmem:[%s2] sm:$0xff]
  %v38 = vld [vmem:[%s3] sm:$0xff]
  %v39 = vld [vmem:[%s3 + $0x8] sm:$0xff]
  %v40 = vld [vmem:[%s3 + $0x10] sm:$0xff]
  %v41 = vld [vmem:[%s4] sm:$0xff]
  %vm42 = vcmask 64512
  %v44 = vsel %vm42, %v36, 0
  %46 = vmatprep.subr.mxu0 0.0
  %47 = vmatpush1.msra.mxu0 %v41
  %48 = vmatprep.subr.mxu0 0.0
  %49 = vmatpush1.msra.mxu0 0.0
  %50 = vmatprep.subr.mxu0 0.0
  %51 = vmatpush1.msra.mxu0 0.0
  %52 = vmatprep.subr.mxu0 0.0
  %53 = vmatpush1.msra.mxu0 0.0
  %54 = vmatprep.subr.mxu0 0.0
  %55 = vmatpush1.msra.mxu0 0.0
  %56 = vmatprep.subr.mxu0 0.0
  %57 = vmatpush1.msra.mxu0 0.0
  %58 = vmatprep.subr.mxu0 0.0
  %59 = vmatpush1.msra.mxu0 0.0
  %60 = vmatprep.subr.mxu0 0.0
  %61 = vmatpush1.msra.mxu0 0.0
  %62 = vmatprep.subr.mxu0 0.0
  %63 = vmatpush1.msra.mxu0 0.0
  %64 = vmatprep.subr.mxu0 0.0
  %65 = vmatpush1.msra.mxu0 0.0
  %66 = vmatprep.subr.mxu0 0.0
  %67 = vmatpush1.msra.mxu0 0.0
  %68 = vmatprep.subr.mxu0 0.0
  %69 = vmatpush1.msra.mxu0 0.0
  %70 = vmatprep.subr.mxu0 0.0
  %71 = vmatpush1.msra.mxu0 0.0
  %72 = vmatprep.subr.mxu0 0.0
  %73 = vmatpush1.msra.mxu0 0.0
  %74 = vmatprep.subr.mxu0 0.0
  %75 = vmatpush1.msra.mxu0 0.0
  %76 = vmatprep.subr.mxu0 0.0
  %77 = vmatpush1.msra.mxu0 0.0
  %78 = vmatprep.subr.mxu0 0.0
  %79 = vmatpush1.msra.mxu0 0.0
  %80 = vmatprep.subr.mxu0 0.0
  %81 = vmatpush1.msra.mxu0 0.0
  %82 = vmatprep.subr.mxu0 0.0
  %83 = vmatpush1.msra.mxu0 0.0
  %84 = vmatprep.subr.mxu0 0.0
  %85 = vmatpush1.msra.mxu0 0.0
  %86 = vmatprep.subr.mxu0 0.0
  %87 = vmatpush1.msra.mxu0 0.0
  %88 = vmatprep.subr.mxu0 0.0
  %89 = vmatpush1.msra.mxu0 0.0
  %90 = vmatprep.subr.mxu0 0.0
  %91 = vmatpush1.msra.mxu0 0.0
  %92 = vmatprep.subr.mxu0 0.0
  %93 = vmatpush1.msra.mxu0 0.0
  %94 = vmatprep.subr.mxu0 0.0
  %95 = vmatpush1.msra.mxu0 0.0
  %96 = vmatprep.subr.mxu0 0.0
  %97 = vmatpush1.msra.mxu0 0.0
  %98 = vmatprep.subr.mxu0 0.0
  %99 = vmatpush1.msra.mxu0 0.0
  %100 = vmatprep.subr.mxu0 0.0
  %101 = vmatpush1.msra.mxu0 0.0
  %102 = vmatprep.subr.mxu0 0.0
  %103 = vmatpush1.msra.mxu0 0.0
  %104 = vmatprep.subr.mxu0 0.0
  %105 = vmatpush1.msra.mxu0 0.0
  %106 = vmatprep.subr.mxu0 0.0
  %107 = vmatpush1.msra.mxu0 0.0
  %108 = vmatprep.subr.mxu0 0.0
  %109 = vmatpush1.msra.mxu0 0.0
  %110 = vmatprep.mubr.f32.mxu0 0.0
  %111 = vmatmul.mubr.f32.gmra.mrb[0].mxu0 %v44
  %v112 = vpop.f32.mrb[0].mxu0
  %v113 = vadd.f32 0.0, %v112
  %v114 = vpop.f32.mrb[0].mxu0
  %115 = vdwg.mxu0
  %vm116 = vcmask 195584
  %v118 = vsel %vm116, %v35, 0
  %120 = vmatprep.subr.mxu0 0.0
  %121 = vmatpush1.msra.mxu0 %v38
  %122 = vmatprep.subr.mxu0 0.0
  %123 = vmatpush1.msra.mxu0 %v39
  %124 = vmatprep.subr.mxu0 0.0
  %125 = vmatpush1.msra.mxu0 %v40
  %126 = vmatprep.subr.mxu0 0.0
  %127 = vmatpush1.msra.mxu0 0.0
  %128 = vmatprep.subr.mxu0 0.0
  %129 = vmatpush1.msra.mxu0 0.0
  %130 = vmatprep.subr.mxu0 0.0
  %131 = vmatpush1.msra.mxu0 0.0
  %132 = vmatprep.subr.mxu0 0.0
  %133 = vmatpush1.msra.mxu0 0.0
  %134 = vmatprep.subr.mxu0 0.0
  %135 = vmatpush1.msra.mxu0 0.0
  %136 = vmatprep.subr.mxu0 0.0
  %137 = vmatpush1.msra.mxu0 0.0
  %138 = vmatprep.subr.mxu0 0.0
  %139 = vmatpush1.msra.mxu0 0.0
  %140 = vmatprep.subr.mxu0 0.0
  %141 = vmatpush1.msra.mxu0 0.0
  %142 = vmatprep.subr.mxu0 0.0
  %143 = vmatpush1.msra.mxu0 0.0
  %144 = vmatprep.subr.mxu0 0.0
  %145 = vmatpush1.msra.mxu0 0.0
  %146 = vmatprep.subr.mxu0 0.0
  %147 = vmatpush1.msra.mxu0 0.0
  %148 = vmatprep.subr.mxu0 0.0
  %149 = vmatpush1.msra.mxu0 0.0
  %150 = vmatprep.subr.mxu0 0.0
  %151 = vmatpush1.msra.mxu0 0.0
  %152 = vmatprep.subr.mxu0 0.0
  %153 = vmatpush1.msra.mxu0 0.0
  %154 = vmatprep.subr.mxu0 0.0
  %155 = vmatpush1.msra.mxu0 0.0
  %156 = vmatprep.subr.mxu0 0.0
  %157 = vmatpush1.msra.mxu0 0.0
  %158 = vmatprep.subr.mxu0 0.0
  %159 = vmatpush1.msra.mxu0 0.0
  %160 = vmatprep.subr.mxu0 0.0
  %161 = vmatpush1.msra.mxu0 0.0
  %162 = vmatprep.subr.mxu0 0.0
  %163 = vmatpush1.msra.mxu0 0.0
  %164 = vmatprep.subr.mxu0 0.0
  %165 = vmatpush1.msra.mxu0 0.0
  %166 = vmatprep.subr.mxu0 0.0
  %167 = vmatpush1.msra.mxu0 0.0
  %168 = vmatprep.subr.mxu0 0.0
  %169 = vmatpush1.msra.mxu0 0.0
  %170 = vmatprep.subr.mxu0 0.0
  %171 = vmatpush1.msra.mxu0 0.0
  %172 = vmatprep.subr.mxu0 0.0
  %173 = vmatpush1.msra.mxu0 0.0
  %174 = vmatprep.subr.mxu0 0.0
  %175 = vmatpush1.msra.mxu0 0.0
  %176 = vmatprep.subr.mxu0 0.0
  %177 = vmatpush1.msra.mxu0 0.0
  %178 = vmatprep.subr.mxu0 0.0
  %179 = vmatpush1.msra.mxu0 0.0
  %180 = vmatprep.subr.mxu0 0.0
  %181 = vmatpush1.msra.mxu0 0.0
  %182 = vmatprep.subr.mxu0 0.0
  %183 = vmatpush1.msra.mxu0 0.0
  %184 = vmatprep.mubr.f32.mxu0 0.0
  %185 = vmatmul.mubr.f32.gmra.mrb[0].mxu0 %v118
  %v186 = vpop.f32.mrb[0].mxu0
  %v187 = vadd.f32 %v113, %v186
  %v188 = vpop.f32.mrb[0].mxu0
  %189 = vdwg.mxu0
  %v190 = vld [vmem:[%s5] sm:$0x1]
  %v192 = vlaneseq
  %v193 = vshrl.u32 %v192, 7
  %v194 = vsub.s32 0, %v193
  %v195 = vrot.slane %v190, %v194
  %v197 = vadd.f32 %v187, %v195
  %v198 = vmax.f32 %v197, 0.0
  %v199 = vld [vmem:[%s6] sm:$0xff]
  %v200 = vld [vmem:[%s6 + $0x8] sm:$0xff]
  %v201 = vld [vmem:[%s6 + $0x10] sm:$0xff]
  %v202 = vld [vmem:[%s6 + $0x18] sm:$0xff]
  %v203 = vld [vmem:[%s7] sm:$0x1]
  %v205 = vlaneseq
  %v206 = vshrl.u32 %v205, 7
  %v207 = vsub.s32 0, %v206
  %v208 = vrot.slane %v203, %v207
  %vm210 = vcmask 261120
  %v212 = vsel %vm210, %v198, 0
  %214 = vmatprep.subr.mxu0 0.0
  %215 = vmatpush1.msra.mxu0 %v199
  %216 = vmatprep.subr.mxu0 0.0
  %217 = vmatpush1.msra.mxu0 %v200
  %218 = vmatprep.subr.mxu0 0.0
  %219 = vmatpush1.msra.mxu0 %v201
  %220 = vmatprep.subr.mxu0 0.0
  %221 = vmatpush1.msra.mxu0 %v202
  %222 = vmatprep.subr.mxu0 0.0
  %223 = vmatpush1.msra.mxu0 0.0
  %224 = vmatprep.subr.mxu0 0.0
  %225 = vmatpush1.msra.mxu0 0.0
  %226 = vmatprep.subr.mxu0 0.0
  %227 = vmatpush1.msra.mxu0 0.0
  %228 = vmatprep.subr.mxu0 0.0
  %229 = vmatpush1.msra.mxu0 0.0
  %230 = vmatprep.subr.mxu0 0.0
  %231 = vmatpush1.msra.mxu0 0.0
  %232 = vmatprep.subr.mxu0 0.0
  %233 = vmatpush1.msra.mxu0 0.0
  %234 = vmatprep.subr.mxu0 0.0
  %235 = vmatpush1.msra.mxu0 0.0
  %236 = vmatprep.subr.mxu0 0.0
  %237 = vmatpush1.msra.mxu0 0.0
  %238 = vmatprep.subr.mxu0 0.0
  %239 = vmatpush1.msra.mxu0 0.0
  %240 = vmatprep.subr.mxu0 0.0
  %241 = vmatpush1.msra.mxu0 0.0
  %242 = vmatprep.subr.mxu0 0.0
  %243 = vmatpush1.msra.mxu0 0.0
  %244 = vmatprep.subr.mxu0 0.0
  %245 = vmatpush1.msra.mxu0 0.0
  %246 = vmatprep.subr.mxu0 0.0
  %247 = vmatpush1.msra.mxu0 0.0
  %248 = vmatprep.subr.mxu0 0.0
  %249 = vmatpush1.msra.mxu0 0.0
  %250 = vmatprep.subr.mxu0 0.0
  %251 = vmatpush1.msra.mxu0 0.0
  %252 = vmatprep.subr.mxu0 0.0
  %253 = vmatpush1.msra.mxu0 0.0
  %254 = vmatprep.subr.mxu0 0.0
  %255 = vmatpush1.msra.mxu0 0.0
  %256 = vmatprep.subr.mxu0 0.0
  %257 = vmatpush1.msra.mxu0 0.0
  %258 = vmatprep.subr.mxu0 0.0
  %259 = vmatpush1.msra.mxu0 0.0
  %260 = vmatprep.subr.mxu0 0.0
  %261 = vmatpush1.msra.mxu0 0.0
  %262 = vmatprep.subr.mxu0 0.0
  %263 = vmatpush1.msra.mxu0 0.0
  %264 = vmatprep.subr.mxu0 0.0
  %265 = vmatpush1.msra.mxu0 0.0
  %266 = vmatprep.subr.mxu0 0.0
  %267 = vmatpush1.msra.mxu0 0.0
  %268 = vmatprep.subr.mxu0 0.0
  %269 = vmatpush1.msra.mxu0 0.0
  %270 = vmatprep.subr.mxu0 0.0
  %271 = vmatpush1.msra.mxu0 0.0
  %272 = vmatprep.subr.mxu0 0.0
  %273 = vmatpush1.msra.mxu0 0.0
  %274 = vmatprep.subr.mxu0 0.0
  %275 = vmatpush1.msra.mxu0 0.0
  %276 = vmatprep.subr.mxu0 0.0
  %277 = vmatpush1.msra.mxu0 0.0
  %278 = vmatprep.mubr.f32.mxu0 0.0
  %279 = vmatmul.mubr.f32.gmra.mrb[0].mxu0 %v212
  %v280 = vpop.f32.mrb[0].mxu0
  %v281 = vadd.f32 %v208, %v280
  %v282 = vpop.f32.mrb[0].mxu0
  %283 = vdwg.mxu0
  %v284 = vmax.f32 %v281, 0.0
  %v285 = vld [vmem:[%s8] sm:$0xff]
  %v286 = vld [vmem:[%s8 + $0x8] sm:$0xff]
  %v287 = vld [vmem:[%s8 + $0x10] sm:$0xff]
  %v288 = vld [vmem:[%s8 + $0x18] sm:$0xff]
  %v289 = vld [vmem:[%s9] sm:$0x1]
  %v291 = vlaneseq
  %v292 = vshrl.u32 %v291, 7
  %v293 = vsub.s32 0, %v292
  %v294 = vrot.slane %v289, %v293
  %v297 = vsel %vm210, %v284, 0
  %299 = vmatprep.subr.mxu0 0.0
  %300 = vmatpush1.msra.mxu0 %v285
  %301 = vmatprep.subr.mxu0 0.0
  %302 = vmatpush1.msra.mxu0 %v286
  %303 = vmatprep.subr.mxu0 0.0
  %304 = vmatpush1.msra.mxu0 %v287
  %305 = vmatprep.subr.mxu0 0.0
  %306 = vmatpush1.msra.mxu0 %v288
  %307 = vmatprep.subr.mxu0 0.0
  %308 = vmatpush1.msra.mxu0 0.0
  %309 = vmatprep.subr.mxu0 0.0
  %310 = vmatpush1.msra.mxu0 0.0
  %311 = vmatprep.subr.mxu0 0.0
  %312 = vmatpush1.msra.mxu0 0.0
  %313 = vmatprep.subr.mxu0 0.0
  %314 = vmatpush1.msra.mxu0 0.0
  %315 = vmatprep.subr.mxu0 0.0
  %316 = vmatpush1.msra.mxu0 0.0
  %317 = vmatprep.subr.mxu0 0.0
  %318 = vmatpush1.msra.mxu0 0.0
  %319 = vmatprep.subr.mxu0 0.0
  %320 = vmatpush1.msra.mxu0 0.0
  %321 = vmatprep.subr.mxu0 0.0
  %322 = vmatpush1.msra.mxu0 0.0
  %323 = vmatprep.subr.mxu0 0.0
  %324 = vmatpush1.msra.mxu0 0.0
  %325 = vmatprep.subr.mxu0 0.0
  %326 = vmatpush1.msra.mxu0 0.0
  %327 = vmatprep.subr.mxu0 0.0
  %328 = vmatpush1.msra.mxu0 0.0
  %329 = vmatprep.subr.mxu0 0.0
  %330 = vmatpush1.msra.mxu0 0.0
  %331 = vmatprep.subr.mxu0 0.0
  %332 = vmatpush1.msra.mxu0 0.0
  %333 = vmatprep.subr.mxu0 0.0
  %334 = vmatpush1.msra.mxu0 0.0
  %335 = vmatprep.subr.mxu0 0.0
  %336 = vmatpush1.msra.mxu0 0.0
  %337 = vmatprep.subr.mxu0 0.0
  %338 = vmatpush1.msra.mxu0 0.0
  %339 = vmatprep.subr.mxu0 0.0
  %340 = vmatpush1.msra.mxu0 0.0
  %341 = vmatprep.subr.mxu0 0.0
  %342 = vmatpush1.msra.mxu0 0.0
  %343 = vmatprep.subr.mxu0 0.0
  %344 = vmatpush1.msra.mxu0 0.0
  %345 = vmatprep.subr.mxu0 0.0
  %346 = vmatpush1.msra.mxu0 0.0
  %347 = vmatprep.subr.mxu0 0.0
  %348 = vmatpush1.msra.mxu0 0.0
  %349 = vmatprep.subr.mxu0 0.0
  %350 = vmatpush1.msra.mxu0 0.0
  %351 = vmatprep.subr.mxu0 0.0
  %352 = vmatpush1.msra.mxu0 0.0
  %353 = vmatprep.subr.mxu0 0.0
  %354 = vmatpush1.msra.mxu0 0.0
  %355 = vmatprep.subr.mxu0 0.0
  %356 = vmatpush1.msra.mxu0 0.0
  %357 = vmatprep.subr.mxu0 0.0
  %358 = vmatpush1.msra.mxu0 0.0
  %359 = vmatprep.subr.mxu0 0.0
  %360 = vmatpush1.msra.mxu0 0.0
  %361 = vmatprep.subr.mxu0 0.0
  %362 = vmatpush1.msra.mxu0 0.0
  %363 = vmatprep.mubr.f32.mxu0 0.0
  %364 = vmatmul.mubr.f32.gmra.mrb[0].mxu0 %v297
  %v365 = vpop.f32.mrb[0].mxu0
  %v366 = vadd.f32 %v294, %v365
  %v367 = vpop.f32.mrb[0].mxu0
  %368 = vdwg.mxu0
  %v369 = vmax.f32 %v366, -20.0
  %v370 = vmin.f32 %v369, 2.0
  %v371 = vmul.f32 %v370, 1.442695
  %v372 = vpow.pop %v371
  %374 = vrot.lane.b32.xlu0 %v37, 8
  %v375 = vpop.permute.xlu0 %374
  %v377 = vmul.f32 %v372, %v375
  %379 = vrot.lane.b32.xlu0 %v377, 120
  %v380 = vpop.permute.xlu0 %379
  %v382 = vadd.f32 %v366, %v380
  %v383 = vtanh.pop %v382
  %v384 = vmul.f32 %v37, %v37
  %v385 = vmul.f32 %v384, -0.5
  %387 = vrot.lane.b32.xlu0 %v370, 120
  %v388 = vpop.permute.xlu0 %387
  %v390 = vsub.f32 %v385, %v388
  %v391 = vsub.f32 %v390, 0.9189385
  %v392 = vmul.f32 %v383, %v383
  %v393 = vsub.f32 1.0, %v392
  %v394 = vadd.f32 %v393, 1e-06
  %v395 = vlog2.pop %v394
  %v396 = vmul.f32 %v395, 0.6931472
  %v397 = vsub.f32 %v391, %v396
  %v398 = vsel %vm42, %v397, 0.0
  %399 = vadd.xlane.f32.xlu0 %v398
  %v400 = vpop.xlane.xlu0 %399
  %401 = vst.msk [vmem:[%s10] sm:$0xff] %vm42, %v383
  %403 = vrot.lane.b32.xlu0 %v366, 8
  %v404 = vpop.permute.xlu0 %403
  %vm406 = vcmask 130112
  %407 = vst.msk [vmem:[%s10] sm:$0xff] %vm406, %v404
  %408 = vrot.lane.b32.xlu0 %v370, 8
  %v409 = vpop.permute.xlu0 %408
  %vm411 = vcmask 195712
  %412 = vst.msk [vmem:[%s10] sm:$0xff] %vm411, %v409
  %414 = vrot.lane.b32.xlu0 %v372, 16
  %v415 = vpop.permute.xlu0 %414
  %vm417 = vcmask 261312
  %418 = vst.msk [vmem:[%s10] sm:$0xff] %vm417, %v415
  %420 = vrot.lane.b32.xlu0 %v382, 32
  %v421 = vpop.permute.xlu0 %420
  %vm423 = vcmask 326912
  %424 = vst.msk [vmem:[%s10] sm:$0xff] %vm423, %v421
  %vm425 = vcmask 335168
  %426 = vst.msk [vmem:[%s10] sm:$0xff] %vm425, %v400
  %vm427 = vcmask 1047880
  %428 = vst.msk [vmem:[%s10] sm:$0xff] %vm427, 0.0
  // Predicated region
  $region42: #{pearl_agent2_forward.1} parent=0 // pred_check
    _
  $region43: #{pearl_agent2_forward.1} parent=0 // pred_check_branch
    %430 = sbr.rel (0) target = $region45
  $region44: #{pearl_agent2_forward.1} parent=0 // pred_region
    _
  $region45: #{pearl_agent2_forward.1} parent=0 // pred_fallthru
    _
  // Predicated region
  $region46: #{pearl_agent2_forward.1} parent=0 // pred_check
    _
  $region47: #{pearl_agent2_forward.1} parent=0 // pred_check_branch
    %432 = sbr.rel (0) target = $region49
  $region48: #{pearl_agent2_forward.1} parent=0 // pred_region
    _
  $region49: #{pearl_agent2_forward.1} parent=0 // pred_fallthru
    _

</llo_original>
